<compile_context>
chip_gen: v5e
topology: v5e:2x2
jax: 0.10.0
libtpu: 0.0.40
codegen_flags: <defaults>
</compile_context>

<pallas_src>
import jax
import jax.numpy as jnp
from jax.experimental import pallas as pl
from jax.experimental.pallas import tpu as pltpu


def decoder_kernel(z_ref, w1_ref, b1_ref, w2_ref, b2_ref, o_ref):
    """One (fc2-column-tile, batch-tile) step of the decoder forward.

    fc1 + LeakyReLU(0.2) is recomputed per tile (~2*B*code*512 flops, i.e.
    negligible next to the W2 HBM stream).  No cross-step scratch -> no carried
    state -> both grid axes are "parallel" (v7x megacore can split them).
    """
    h = jnp.dot(z_ref[...], w1_ref[...], preferred_element_type=jnp.float32)
    h = h + b1_ref[...]
    h = jnp.where(h > 0, h, 0.2 * h)              # LeakyReLU(0.2), f32 VPU (v5e-safe)
    y = jnp.dot(h.astype(w2_ref.dtype), w2_ref[...],
                preferred_element_type=jnp.float32)
    y = y + b2_ref[...]
    o_ref[...] = jax.nn.sigmoid(y)                # f32 EUP exp (v5e-safe)


def _vmem_budget_bytes():
    """Generation-aware budget for the double-buffered W2 column tile."""
    cap = None
    try:
        cap = getattr(pltpu.get_tpu_info(), "vmem_capacity_bytes", None)
    except Exception:
        cap = None
    if cap is None:
        cap = 64 << 20                 # be conservative: assume v7x per-TC VMEM
    # v7x (<=64 MiB physical): keep the W2 stream well under the scoped limit.
    # v5e/v6e (128 MiB): allow larger tiles for better HBM burst efficiency.
    return (24 << 20) if cap <= (64 << 20) else (48 << 20)


def _pick_tn(N, hidden, itemsize, budget_bytes):
    """Column-tile width for W2: largest 128-multiple divisor of N whose
    double-buffered tile fits the budget.  Prefer >=2 tiles (so the axis can
    split across v7x's two TCs) of >=512 lanes (so ~0.35us/step overhead and
    masked-store risk stay negligible)."""
    if N % 128 != 0:
        return N                                   # full-extent block is allowed
    fits = [c for c in range(128, N + 1, 128)
            if N % c == 0 and 2 * hidden * c * itemsize <= budget_bytes]
    if not fits:
        return 128
    pref = [c for c in fits if N // c >= 2 and c >= 512]
    if pref:
        return max(pref)
    two = [c for c in fits if N // c >= 2]
    return max(two) if two else max(fits)


def _pick_batch_tile(B):
    """Small batches: pad only to 8 sublanes (unmasked stores).  Large batches:
    256-row tiles fill the MXU M dim on v6e/v7x (2 passes on v5e's 4x128 MXU)."""
    B8 = max(8, ((B + 7) // 8) * 8)
    if B8 <= 256:
        return B8, B8
    tb = 256
    return tb, ((B + tb - 1) // tb) * tb


def decoder_forward(z, w1, b1, w2, b2, output_shape, *, tn=None,
                    param_dtype=jnp.bfloat16):
    """z: (B, code_size) f32 -> (B, C, H, W) f32.

    param_dtype=jnp.bfloat16 (default) halves the HBM-bound W2 stream; all
    accumulation/elementwise math stays f32.  param_dtype=None = f32 weights.
    """
    # TODO(synk): optional int8-quantized W2 path (dequant folded after the f32
    # accumulate) would cut the W2 stream 4x on v5e/v6e; not portable to v7x
    # (its MXU has no int path).
    # TODO(synk): if this decoder runs repeatedly per model step, pin W1/W2
    # resident via a cross-call VMEM/semaphore output (P10) instead of
    # re-streaming them from HBM on every call.
    B, code = z.shape
    hidden = w1.shape[1]
    N = w2.shape[1]
    assert N == output_shape[0] * output_shape[1] * output_shape[2]

    if param_dtype is not None:
        w1 = w1.astype(param_dtype)
        w2 = w2.astype(param_dtype)
        z_in = z.astype(param_dtype)
    else:
        z_in = z

    tb, B_pad = _pick_batch_tile(B)
    if B_pad != B:
        z_in = jnp.pad(z_in, ((0, B_pad - B), (0, 0)))
    n_bt = B_pad // tb

    w_item = jnp.dtype(w2.dtype).itemsize
    if tn is None:
        tn = _pick_tn(N, hidden, w_item, _vmem_budget_bytes())
    assert N % tn == 0
    n_ct = N // tn

    b1_2d = b1.reshape(1, hidden).astype(jnp.float32)
    b2_2d = b2.reshape(1, N).astype(jnp.float32)

    cost = pl.CostEstimate(
        flops=2 * B_pad * (code * hidden * n_ct + hidden * N),
        transcendentals=B_pad * N,                       # sigmoid exp per output
        bytes_accessed=(z_in.size * z_in.dtype.itemsize
                        + w1.size * w_item + w2.size * w_item
                        + b1_2d.size * 4 + b2_2d.size * 4
                        + B_pad * N * 4),
    )

    # Scoped-VMEM estimate (double-buffered blocks); only raise the limit when
    # the default would not cover it (keeps v7x's smaller VMEM safe).
    vmem_need = 2 * (tb * code * z_in.dtype.itemsize
                     + code * hidden * w_item + hidden * 4
                     + hidden * tn * w_item + tn * 4
                     + tb * tn * 4)
    cp_kwargs = dict(dimension_semantics=("parallel", "parallel"))
    if vmem_need > (28 << 20):
        cp_kwargs["vmem_limit_bytes"] = int(min(vmem_need + (8 << 20), 120 << 20))

    # Grid = (fc2 column tiles, batch tiles).  Batch is the INNER axis and W2's
    # index_map is constant over it, so each W2 column tile is fetched once and
    # reused across every batch tile.
    out_flat = pl.pallas_call(
        decoder_kernel,
        out_shape=jax.ShapeDtypeStruct((B_pad, N), jnp.float32),
        grid_spec=pltpu.PrefetchScalarGridSpec(
            num_scalar_prefetch=0,
            grid=(n_ct, n_bt),
            in_specs=[
                pl.BlockSpec((tb, code), lambda j, i: (i, 0)),      # z batch tile
                pl.BlockSpec((code, hidden), lambda j, i: (0, 0)),  # W1 (full)
                pl.BlockSpec((1, hidden), lambda j, i: (0, 0)),     # b1 (full)
                pl.BlockSpec((hidden, tn), lambda j, i: (0, j)),    # W2 column tile
                pl.BlockSpec((1, tn), lambda j, i: (0, j)),         # b2 tile
            ],
            out_specs=pl.BlockSpec((tb, tn), lambda j, i: (i, j)),
        ),
        compiler_params=pltpu.CompilerParams(**cp_kwargs),
        cost_estimate=cost,
    )(z_in, w1, b1_2d, w2, b2_2d)

    return out_flat[:B].reshape(B, *output_shape)


def init_params(key, code_size, hidden, output_size):
    # Deterministic synthetic init (PyTorch-Linear-like uniform bounds).
    k1, k2, k3, k4 = jax.random.split(key, 4)
    bound1 = 1.0 / jnp.sqrt(code_size)
    bound2 = 1.0 / jnp.sqrt(hidden)
    w1 = jax.random.uniform(k1, (code_size, hidden), jnp.float32, -bound1, bound1)
    b1 = jax.random.uniform(k2, (hidden,), jnp.float32, -bound1, bound1)
    w2 = jax.random.uniform(k3, (hidden, output_size), jnp.float32, -bound2, bound2)
    b2 = jax.random.uniform(k4, (output_size,), jnp.float32, -bound2, bound2)
    return w1, b1, w2, b2


def _reference(z, w1, b1, w2, b2, output_shape):
    h = z @ w1 + b1
    h = jnp.where(h > 0, h, 0.2 * h)
    return jax.nn.sigmoid(h @ w2 + b2).reshape(z.shape[0], *output_shape)


if __name__ == "__main__":
    # Small shapes consistent with the module's forward:
    #   batch=2, code_size=8, hidden=512 (fixed by module), output_shape=(4,16,16)
    B = 2
    code_size = 8
    hidden = 512
    output_shape = (4, 16, 16)
    output_size = output_shape[0] * output_shape[1] * output_shape[2]

    key = jax.random.PRNGKey(0)
    kz, kp, kz2 = jax.random.split(key, 3)
    z = jax.random.normal(kz, (B, code_size), jnp.float32)
    w1, b1, w2, b2 = init_params(kp, code_size, hidden, output_size)
    y_ref = _reference(z, w1, b1, w2, b2, output_shape)

    # Default path: bf16 weights (dominant W2 HBM stream halved), f32 math.
    out = decoder_forward(z, w1, b1, w2, b2, output_shape)
    out = jax.block_until_ready(out)
    assert out.shape == (B, *output_shape)
    assert jnp.allclose(out, y_ref, atol=2e-2, rtol=2e-2)

    # f32 weight path: bit-tight against the pure-JAX reference.
    out_f32 = decoder_forward(z, w1, b1, w2, b2, output_shape, param_dtype=None)
    out_f32 = jax.block_until_ready(out_f32)
    assert jnp.allclose(out_f32, y_ref, atol=1e-5, rtol=1e-5)

    # Larger batch exercises the batch-tile grid axis (each W2 column tile is
    # DMA'd once and reused across batch tiles).
    B2 = 300
    z2 = jax.random.normal(kz2, (B2, code_size), jnp.float32)
    out_b = decoder_forward(z2, w1, b1, w2, b2, output_shape)
    out_b = jax.block_until_ready(out_b)
    y_ref_b = _reference(z2, w1, b1, w2, b2, output_shape)
    assert out_b.shape == (B2, *output_shape)
    assert jnp.allclose(out_b, y_ref_b, atol=2e-2, rtol=2e-2)

    print("KERNEL_OK")
</pallas_src>

<mosaic_0001>
module attributes {stable_mosaic.version = 11 : i64} {
  func.func @decoder_kernel(%arg0: i32, %arg1: i32, %arg2: memref<8x8xbf16, #tpu.memory_space<vmem>>, %arg3: memref<8x512xbf16, #tpu.memory_space<vmem>>, %arg4: memref<1x512xf32, #tpu.memory_space<vmem>>, %arg5: memref<512x512xbf16, #tpu.memory_space<vmem>>, %arg6: memref<1x512xf32, #tpu.memory_space<vmem>>, %arg7: memref<8x512xf32, #tpu.memory_space<vmem>>) attributes {dimension_semantics = [#tpu.dimension_semantics<parallel>, #tpu.dimension_semantics<parallel>], iteration_bounds = array<i64: 2, 1>, scalar_prefetch = 0 : i64, scratch_operands = 0 : i64, tpu.core_type = #tpu.core_type<tc>, window_params = [{transform_indices = @transform_0, window_bounds = array<i64: 8, 8>}, {pipeline_mode = #tpu.pipeline_mode<synchronous>, transform_indices = @transform_1, window_bounds = array<i64: 8, 512>}, {pipeline_mode = #tpu.pipeline_mode<synchronous>, transform_indices = @transform_2, window_bounds = array<i64: 1, 512>}, {transform_indices = @transform_3, window_bounds = array<i64: 512, 512>}, {transform_indices = @transform_4, window_bounds = array<i64: 1, 512>}, {transform_indices = @transform_5, window_bounds = array<i64: 8, 512>}]} {
    %c0 = arith.constant 0 : index
    %c0_0 = arith.constant 0 : index
    %0 = vector.load %arg2[%c0, %c0_0] : memref<8x8xbf16, #tpu.memory_space<vmem>>, vector<8x8xbf16>
    %c0_1 = arith.constant 0 : index
    %c0_2 = arith.constant 0 : index
    %1 = vector.load %arg3[%c0_1, %c0_2] : memref<8x512xbf16, #tpu.memory_space<vmem>>, vector<8x512xbf16>
    %cst = arith.constant dense<0.000000e+00> : vector<8x512xf32>
    %2 = tpu.matmul %0, %1, %cst {dimension_numbers = #tpu.dot_dimension_numbers<[1], [0], [0], [1], [0, 0, 1, 1], [], []>} : vector<8x8xbf16>, vector<8x512xbf16>, vector<8x512xf32> -> vector<8x512xf32>
    %c0_3 = arith.constant 0 : index
    %c0_4 = arith.constant 0 : index
    %3 = vector.load %arg4[%c0_3, %c0_4] : memref<1x512xf32, #tpu.memory_space<vmem>>, vector<1x512xf32>
    %4 = vector.broadcast %3 : vector<1x512xf32> to vector<8x512xf32>
    %5 = arith.addf %2, %4 : vector<8x512xf32>
    %cst_5 = arith.constant 0.000000e+00 : f32
    %6 = vector.broadcast %cst_5 : f32 to vector<8x512xf32>
    %7 = arith.cmpf ogt, %5, %6 : vector<8x512xf32>
    %cst_6 = arith.constant 2.000000e-01 : f32
    %8 = vector.broadcast %cst_6 : f32 to vector<8x512xf32>
    %9 = arith.mulf %8, %5 : vector<8x512xf32>
    %10 = arith.select %7, %5, %9 : vector<8x512xi1>, vector<8x512xf32>
    %11 = arith.truncf %10 : vector<8x512xf32> to vector<8x512xbf16>
    %c0_7 = arith.constant 0 : index
    %c0_8 = arith.constant 0 : index
    %12 = vector.load %arg5[%c0_7, %c0_8] : memref<512x512xbf16, #tpu.memory_space<vmem>>, vector<512x512xbf16>
    %cst_9 = arith.constant dense<0.000000e+00> : vector<8x512xf32>
    %13 = tpu.matmul %11, %12, %cst_9 {dimension_numbers = #tpu.dot_dimension_numbers<[1], [0], [0], [1], [0, 0, 1, 1], [], []>} : vector<8x512xbf16>, vector<512x512xbf16>, vector<8x512xf32> -> vector<8x512xf32>
    %c0_10 = arith.constant 0 : index
    %c0_11 = arith.constant 0 : index
    %14 = vector.load %arg6[%c0_10, %c0_11] : memref<1x512xf32, #tpu.memory_space<vmem>>, vector<1x512xf32>
    %15 = vector.broadcast %14 : vector<1x512xf32> to vector<8x512xf32>
    %16 = arith.addf %13, %15 : vector<8x512xf32>
    %17 = arith.negf %16 : vector<8x512xf32>
    %18 = math.exp %17 : vector<8x512xf32>
    %cst_12 = arith.constant 1.000000e+00 : f32
    %19 = vector.broadcast %cst_12 : f32 to vector<8x512xf32>
    %20 = arith.addf %19, %18 : vector<8x512xf32>
    %21 = arith.divf %19, %20 : vector<8x512xf32>
    %c0_13 = arith.constant 0 : index
    %c0_14 = arith.constant 0 : index
    %22 = vector.load %arg7[%c0_13, %c0_14] : memref<8x512xf32, #tpu.memory_space<vmem>>, vector<8x512xf32>
    tpu.vector_store %arg7[%c0_13, %c0_14], %21 {strides = array<i32>} : memref<8x512xf32, #tpu.memory_space<vmem>>, vector<8x512xf32>,
    return
  }
  func.func @transform_0(%arg0: i32, %arg1: i32) -> (i32, i32) {
    %c0_i32 = arith.constant 0 : i32
    %c0_i32_0 = arith.constant 0 : i32
    return %arg1, %c0_i32 : i32, i32
  }
  func.func @transform_1(%arg0: i32, %arg1: i32) -> (i32, i32) {
    %c0_i32 = arith.constant 0 : i32
    %c0_i32_0 = arith.constant 0 : i32
    %c0_i32_1 = arith.constant 0 : i32
    return %c0_i32, %c0_i32_0 : i32, i32
  }
  func.func @transform_2(%arg0: i32, %arg1: i32) -> (i32, i32) {
    %c0_i32 = arith.constant 0 : i32
    %c0_i32_0 = arith.constant 0 : i32
    %c0_i32_1 = arith.constant 0 : i32
    return %c0_i32, %c0_i32_0 : i32, i32
  }
  func.func @transform_3(%arg0: i32, %arg1: i32) -> (i32, i32) {
    %c0_i32 = arith.constant 0 : i32
    %c0_i32_0 = arith.constant 0 : i32
    return %c0_i32, %arg0 : i32, i32
  }
  func.func @transform_4(%arg0: i32, %arg1: i32) -> (i32, i32) {
    %c0_i32 = arith.constant 0 : i32
    %c0_i32_0 = arith.constant 0 : i32
    return %c0_i32, %arg0 : i32, i32
  }
  func.func @transform_5(%arg0: i32, %arg1: i32) -> (i32, i32) {
    %c0_i32 = arith.constant 0 : i32
    return %arg1, %arg0 : i32, i32
  }
}

</mosaic_0001>

<llo_original>
// kernel: tpu_custom_call.1
$region0: #{tpu_custom_call.1}
  #allocation0 [shape = 'u32[]', space=smem, size = 0x4, offset = 0x4, fixed_abs, tag = 'smem constant byte address 0x4 - core index']
  #allocation1 [shape = 'u32[72,128]{1,0:T(1,128)}', space=vmem, size = 0x9000, scoped, tag = 'internal scratch']
  %s0 = inlined_call_operand.hbm [shape: bf16[8,8], index: 0, kind: input, shape index: {}]
  %s1 = inlined_call_operand.hbm [shape: bf16[8,512], index: 1, kind: input, shape index: {}]
  %s2 = inlined_call_operand.hbm [shape: f32[1,512], index: 2, kind: input, shape index: {}]
  %s3 = inlined_call_operand.hbm [shape: bf16[512,1024], index: 3, kind: input, shape index: {}]
  %s4 = inlined_call_operand.hbm [shape: f32[1,1024], index: 4, kind: input, shape index: {}]
  %s5 = inlined_call_operand.hbm [shape: f32[8,1024], index: 5, kind: output, shape index: {}]
  %s6 = sld [smem:[#allocation0]]
  $region73: #{tpu_custom_call.1} parent=0
    _
  %s8 = ssub.s32 1, %s6
  %s9 = scalar_select 0, %s8, %s6
  $region1: #{tpu_custom_call.1} parent=0
    #allocation2 [shape = 'u8[2048]{0}', space=vmem, size = 0x800, scoped, tag = 'input window, operand 0, single buffered']
    #allocation3 [shape = 's32[2]{0}', space=sflag, size = 0x8, scoped, tag = 'scoped memory for tpu_custom_call.1']
    #allocation4 [shape = 's32[2]{0}', space=sflag, size = 0x8, scoped, tag = 'scoped memory for tpu_custom_call.1']
    #allocation5 [shape = 'u8[8192]{0}', space=vmem, size = 0x2000, scoped, tag = 'input window, operand 1, single buffered']
    #allocation6 [shape = 's32[1]{0}', space=sflag, size = 0x4, scoped, tag = 'scoped memory for tpu_custom_call.1']
    #allocation7 [shape = 'u8[2048]{0}', space=vmem, size = 0x800, scoped, tag = 'input window, operand 2, single buffered']
    #allocation8 [shape = 'u8[1048576]{0}', space=vmem, size = 0x100000, scoped, tag = 'input window, operand 3']
    #allocation9 [shape = 's32[2]{0}', space=sflag, size = 0x8, scoped, tag = 'scoped memory for tpu_custom_call.1']
    #allocation10 [shape = 'u8[4096]{0}', space=vmem, size = 0x1000, scoped, tag = 'input window, operand 4']
    #allocation11 [shape = 'u8[32768]{0}', space=vmem, size = 0x8000, scoped, tag = 'output window, operand 0']
    %10 = vsyncpa [#allocation3], 0
    %11 = vsyncpa [#allocation6], 0
    %12 = vsyncpa [#allocation9], 0
    %s13 = scalar_lea.sflag [#allocation9], 1
    %14 = vsyncpa %s13, 0
    %15 = vsyncpa [#allocation4], 0
    %s16 = scalar_lea.sflag [#allocation4], 1
    %17 = vsyncpa %s16, 0
    loop: start=0, step=1, limit=4
    $region2: #{tpu_custom_call.1} parent=1 // loop_pre_header
      _
    $region3: #{tpu_custom_call.1} parent=1 // loop_header
      %s19 = sphi 0, %s23
      %p20 = scmp.ge.s32.totalorder %s19, 4
      %s26 = sphi 0, %s38
      %s27 = sphi 0, %s34
      %s28 = sphi 0, %s26
      %s29 = sphi 0, %s27
      %s30 = sphi 0, %s28
      %s31 = sphi 0, %s29
      %s41 = sphi 0, %s43
      %s44 = sphi 0, %s41
      %s45 = sphi 0, %s44
      %s61 = sphi 0, %s45
      %s65 = sphi 0, %s65
      %s67 = sphi 0, %s65
      %s68 = sphi 0, %s67
      %s82 = sphi 0, %s68
      %s86 = sphi 0, %s86
      %s88 = sphi 0, %s86
      %s89 = sphi 0, %s88
      %s103 = sphi 0, %s89
      %s109 = sphi 0, %s111
      %s112 = sphi 0, %s109
      %s113 = sphi 0, %s112
      %s129 = sphi 0, %s113
      %s135 = sphi 0, %s137
      %s138 = sphi 0, %s135
      %s139 = sphi 0, %s138
      %s155 = sphi 0, %s139
      %s163 = sphi 0, %s165
      %s166 = sphi 0, %s163
      %s167 = sphi 0, %s166
      %s183 = sphi 0, %s167
    $region4: #{tpu_custom_call.1} parent=1 // loop_header_branch
      %22 = sbr.rel (%p20) target = $region8
    $region5: #{tpu_custom_call.1} parent=1 // loop_body
      %s24 = ssub.s32 %s19, 1
      %s25 = ssub.s32 %s19, 2
      %s32 = sadd.s32 1, %s27
      %p33 = scmp.ge.s32.totalorder %s32, 1
      %s34 = scalar_select %p33, 0, %s32
      %s35 = sadd.s32 1, %s26
      %s36 = scalar_select %p33, %s35, %s26
      %p37 = scmp.ge.s32.totalorder %s36, 2
      %s38 = scalar_select %p37, 0, %s36
      %s39 = ssub.s32 %s27, %s34
      %p40 = scmp.eq.s32.totalorder %s39, 0
      %s42 = sadd.s32 %s41, 1
      %s43 = scalar_select %p40, %s41, %s42
      %p46 = pneg %p40
      %p47 = scmp.eq.s32.totalorder %s19, 1
      %p48 = por %p46, %p47
      %p49 = scmp.ne.s32.totalorder %s41, %s44
      %p50 = scmp.eq.s32.totalorder %s19, 0
      %p51 = por %p49, %p50
      %p52 = scmp.ne.s32.totalorder %s41, %s44
      %p53 = scmp.eq.s32.totalorder %s24, 1
      %p54 = por %p52, %p53
      %p55 = scmp.ne.s32.totalorder %s44, %s45
      %p56 = scmp.eq.s32.totalorder %s24, 0
      %p57 = por %p55, %p56
      %p58 = scmp.ne.s32.totalorder %s44, %s45
      %p59 = scmp.eq.s32.totalorder %s25, 1
      %p60 = por %p58, %p59
      %p62 = scmp.ne.s32.totalorder %s45, %s61
      %p63 = scmp.eq.s32.totalorder %s25, 0
      %p64 = por %p62, %p63
      %s66 = sadd.s32 %s65, 1
      %p69 = scmp.eq.s32.totalorder %s19, 1
      %p70 = scmp.ne.s32.totalorder %s65, %s67
      %p71 = scmp.eq.s32.totalorder %s19, 0
      %p72 = por %p70, %p71
      %p73 = scmp.ne.s32.totalorder %s65, %s67
      %p74 = scmp.eq.s32.totalorder %s24, 1
      %p75 = por %p73, %p74
      %p76 = scmp.ne.s32.totalorder %s67, %s68
      %p77 = scmp.eq.s32.totalorder %s24, 0
      %p78 = por %p76, %p77
      %p79 = scmp.ne.s32.totalorder %s67, %s68
      %p80 = scmp.eq.s32.totalorder %s25, 1
      %p81 = por %p79, %p80
      %p83 = scmp.ne.s32.totalorder %s68, %s82
      %p84 = scmp.eq.s32.totalorder %s25, 0
      %p85 = por %p83, %p84
      %s87 = sadd.s32 %s86, 1
      %p90 = scmp.eq.s32.totalorder %s19, 1
      %p91 = scmp.ne.s32.totalorder %s86, %s88
      %p92 = scmp.eq.s32.totalorder %s19, 0
      %p93 = por %p91, %p92
      %p94 = scmp.ne.s32.totalorder %s86, %s88
      %p95 = scmp.eq.s32.totalorder %s24, 1
      %p96 = por %p94, %p95
      %p97 = scmp.ne.s32.totalorder %s88, %s89
      %p98 = scmp.eq.s32.totalorder %s24, 0
      %p99 = por %p97, %p98
      %p100 = scmp.ne.s32.totalorder %s88, %s89
      %p101 = scmp.eq.s32.totalorder %s25, 1
      %p102 = por %p100, %p101
      %p104 = scmp.ne.s32.totalorder %s89, %s103
      %p105 = scmp.eq.s32.totalorder %s25, 0
      %p106 = por %p104, %p105
      %s107 = ssub.s32 %s26, %s38
      %p108 = scmp.eq.s32.totalorder %s107, 0
      %s110 = sadd.s32 %s109, 1
      %s111 = scalar_select %p108, %s109, %s110
      %p114 = pneg %p108
      %p115 = scmp.eq.s32.totalorder %s19, 1
      %p116 = por %p114, %p115
      %p117 = scmp.ne.s32.totalorder %s109, %s112
      %p118 = scmp.eq.s32.totalorder %s19, 0
      %p119 = por %p117, %p118
      %p120 = scmp.ne.s32.totalorder %s109, %s112
      %p121 = scmp.eq.s32.totalorder %s24, 1
      %p122 = por %p120, %p121
      %p123 = scmp.ne.s32.totalorder %s112, %s113
      %p124 = scmp.eq.s32.totalorder %s24, 0
      %p125 = por %p123, %p124
      %p126 = scmp.ne.s32.totalorder %s112, %s113
      %p127 = scmp.eq.s32.totalorder %s25, 1
      %p128 = por %p126, %p127
      %p130 = scmp.ne.s32.totalorder %s113, %s129
      %p131 = scmp.eq.s32.totalorder %s25, 0
      %p132 = por %p130, %p131
      %s133 = ssub.s32 %s26, %s38
      %p134 = scmp.eq.s32.totalorder %s133, 0
      %s136 = sadd.s32 %s135, 1
      %s137 = scalar_select %p134, %s135, %s136
      %p140 = pneg %p134
      %p141 = scmp.eq.s32.totalorder %s19, 1
      %p142 = por %p140, %p141
      %p143 = scmp.ne.s32.totalorder %s135, %s138
      %p144 = scmp.eq.s32.totalorder %s19, 0
      %p145 = por %p143, %p144
      %p146 = scmp.ne.s32.totalorder %s135, %s138
      %p147 = scmp.eq.s32.totalorder %s24, 1
      %p148 = por %p146, %p147
      %p149 = scmp.ne.s32.totalorder %s138, %s139
      %p150 = scmp.eq.s32.totalorder %s24, 0
      %p151 = por %p149, %p150
      %p152 = scmp.ne.s32.totalorder %s138, %s139
      %p153 = scmp.eq.s32.totalorder %s25, 1
      %p154 = por %p152, %p153
      %p156 = scmp.ne.s32.totalorder %s139, %s155
      %p157 = scmp.eq.s32.totalorder %s25, 0
      %p158 = por %p156, %p157
      %s159 = ssub.s32 %s27, %s34
      %s160 = ssub.s32 %s26, %s38
      %s161 = sor.u32 %s159, %s160
      %p162 = scmp.eq.s32.totalorder %s161, 0
      %s164 = sadd.s32 %s163, 1
      %s165 = scalar_select %p162, %s163, %s164
      %p168 = pneg %p162
      %p169 = scmp.eq.s32.totalorder %s19, 1
      %p170 = por %p168, %p169
      %p171 = scmp.ne.s32.totalorder %s163, %s166
      %p172 = scmp.eq.s32.totalorder %s19, 0
      %p173 = por %p171, %p172
      %p174 = scmp.ne.s32.totalorder %s163, %s166
      %p175 = scmp.eq.s32.totalorder %s24, 1
      %p176 = por %p174, %p175
      %p177 = scmp.ne.s32.totalorder %s166, %s167
      %p178 = scmp.eq.s32.totalorder %s24, 0
      %p179 = por %p177, %p178
      %p180 = scmp.ne.s32.totalorder %s166, %s167
      %p181 = scmp.eq.s32.totalorder %s25, 1
      %p182 = por %p180, %p181
      %p184 = scmp.ne.s32.totalorder %s167, %s183
      %p185 = scmp.eq.s32.totalorder %s25, 0
      %p186 = por %p184, %p185
      %p187 = scmp.le.s32.totalorder 1, %s19
      %p188 = scmp.lt.s32.totalorder %s19, 3
      %p189 = pnand %p187, %p188
      %p190 = pneg %p189
      // Predicated region
      $region9: #{tpu_custom_call.1} parent=5 // pred_check
        _
      $region10: #{tpu_custom_call.1} parent=5 // pred_check_branch
        %192 = sbr.rel (%p189) target = $region12
      $region11: #{tpu_custom_call.1} parent=5 // pred_region
        %s193 = ssub.s32 %s19, 1
        // Predicated region
        $region13: #{tpu_custom_call.1} parent=11 // pred_check
          %p194 = pneg %p57
        $region14: #{tpu_custom_call.1} parent=11 // pred_check_branch
          %196 = sbr.rel (%p194) target = $region16
        $region15: #{tpu_custom_call.1} parent=11 // pred_region
          %198 = vsyncadd [#allocation3], 0
          %s199 = smul.addr %s29, 4
          %s200 = scalar_lea.hbm %s0, %s199
          %s202 = sshll.u32 %s200, 4
          %s203 = int_to_ptr.hbm [resolvable:$true] %s202
          %s204 = sshll.u32 [#allocation2], 4
          %s205 = int_to_ptr.vmem [resolvable:$true] %s204
          %207 = dma.hbm_to_vmem [thread:$0]  %s203, 64, %s205, [#allocation3]
        $region16: #{tpu_custom_call.1} parent=11 // pred_fallthru
          _
        // Predicated region
        $region17: #{tpu_custom_call.1} parent=11 // pred_check
          %p208 = pneg %p78
        $region18: #{tpu_custom_call.1} parent=11 // pred_check_branch
          %210 = sbr.rel (%p208) target = $region20
        $region19: #{tpu_custom_call.1} parent=11 // pred_region
          %212 = vsyncadd [#allocation6], 0
          %s214 = sshll.u32 %s1, 4
          %s215 = int_to_ptr.hbm [resolvable:$true] %s214
          %s216 = sshll.u32 [#allocation5], 4
          %s217 = int_to_ptr.vmem [resolvable:$true] %s216
          %219 = dma.hbm_to_vmem [thread:$0]  %s215, 256, %s217, [#allocation6]
        $region20: #{tpu_custom_call.1} parent=11 // pred_fallthru
          _
        // Predicated region
        $region21: #{tpu_custom_call.1} parent=11 // pred_check
          %p220 = pneg %p99
        $region22: #{tpu_custom_call.1} parent=11 // pred_check_branch
          %222 = sbr.rel (%p220) target = $region24
        $region23: #{tpu_custom_call.1} parent=11 // pred_region
          %224 = vsyncadd [#allocation6], 0
          %s226 = sshll.u32 %s2, 4
          %s227 = int_to_ptr.hbm [resolvable:$true] %s226
          %s228 = sshll.u32 [#allocation7], 4
          %s229 = int_to_ptr.vmem [resolvable:$true] %s228
          %231 = dma.hbm_to_vmem [thread:$0]  %s227, 64, %s229, [#allocation6]
        $region24: #{tpu_custom_call.1} parent=11 // pred_fallthru
          _
      $region12: #{tpu_custom_call.1} parent=5 // pred_fallthru
        _
      %p232 = scmp.lt.s32.totalorder %s19, 2
      // Predicated region
      $region25: #{tpu_custom_call.1} parent=5 // pred_check
        %p233 = pneg %p232
      $region26: #{tpu_custom_call.1} parent=5 // pred_check_branch
        %235 = sbr.rel (%p233) target = $region28
      $region27: #{tpu_custom_call.1} parent=5 // pred_region
        // Predicated region
        $region29: #{tpu_custom_call.1} parent=27 // pred_check
          %p236 = pneg %p119
        $region30: #{tpu_custom_call.1} parent=27 // pred_check_branch
          %238 = sbr.rel (%p236) target = $region32
        $region31: #{tpu_custom_call.1} parent=27 // pred_region
          %s239 = sand.u32 %s19, 1
          %s240 = scalar_lea.sflag [#allocation9], %s239
          %s241 = sand.u32 %s109, 1
          %s242 = smul.addr %s241, 1024
          %s243 = scalar_lea.vmem [#allocation8], %s242
          %s244 = smul.u32 4, %s26
          %246 = vsyncadd %s240, 0
          %s247 = smul.addr %s244, 4
          %s248 = scalar_lea.hbm %s3, %s247
          %s249 = sshll.u32 %s248, 4
          %s250 = int_to_ptr.hbm [resolvable:$true] %s249
          %s251 = sshll.u32 %s243, 4
          %s252 = int_to_ptr.vmem [resolvable:$true] %s251
          %257 = dma.hbm_to_vmem [thread:$0]  %s250, 16384, %s252, %s240, 512, 256, 16
        $region32: #{tpu_custom_call.1} parent=27 // pred_fallthru
          _
        // Predicated region
        $region33: #{tpu_custom_call.1} parent=27 // pred_check
          %p258 = pneg %p145
        $region34: #{tpu_custom_call.1} parent=27 // pred_check_branch
          %260 = sbr.rel (%p258) target = $region36
        $region35: #{tpu_custom_call.1} parent=27 // pred_region
          %s261 = sand.u32 %s19, 1
          %s262 = scalar_lea.sflag [#allocation9], %s261
          %s263 = sand.u32 %s135, 1
          %s264 = smul.addr %s263, 4
          %s265 = scalar_lea.vmem [#allocation10], %s264
          %s266 = smul.u32 4, %s26
          %268 = vsyncadd %s262, 0
          %s269 = scalar_lea.hbm %s4, %s266
          %s271 = sshll.u32 %s269, 4
          %s272 = int_to_ptr.hbm [resolvable:$true] %s271
          %s273 = sshll.u32 %s265, 4
          %s274 = int_to_ptr.vmem [resolvable:$true] %s273
          %276 = dma.hbm_to_vmem [thread:$0]  %s272, 64, %s274, %s262
        $region36: #{tpu_custom_call.1} parent=27 // pred_fallthru
          _
      $region28: #{tpu_custom_call.1} parent=5 // pred_fallthru
        _
      %p277 = scmp.le.s32.totalorder 1, %s19
      %p278 = scmp.lt.s32.totalorder %s19, 3
      %p279 = pnand %p277, %p278
      %p280 = pneg %p279
      // Predicated region
      $region37: #{tpu_custom_call.1} parent=5 // pred_check
        _
      $region38: #{tpu_custom_call.1} parent=5 // pred_check_branch
        %282 = sbr.rel (%p279) target = $region40
      $region39: #{tpu_custom_call.1} parent=5 // pred_region
        %s283 = ssub.s32 %s19, 1
        // Predicated region
        $region41: #{tpu_custom_call.1} parent=39 // pred_check
          %p284 = pneg %p57
        $region42: #{tpu_custom_call.1} parent=39 // pred_check_branch
          %286 = sbr.rel (%p284) target = $region44
        $region43: #{tpu_custom_call.1} parent=39 // pred_region
          %288 = dma.done [#allocation3], 64
        $region44: #{tpu_custom_call.1} parent=39 // pred_fallthru
          _
        // Predicated region
        $region45: #{tpu_custom_call.1} parent=39 // pred_check
          %p289 = pneg %p78
        $region46: #{tpu_custom_call.1} parent=39 // pred_check_branch
          %291 = sbr.rel (%p289) target = $region48
        $region47: #{tpu_custom_call.1} parent=39 // pred_region
          %293 = dma.done [#allocation6], 256
        $region48: #{tpu_custom_call.1} parent=39 // pred_fallthru
          _
        // Predicated region
        $region49: #{tpu_custom_call.1} parent=39 // pred_check
          %p294 = pneg %p99
        $region50: #{tpu_custom_call.1} parent=39 // pred_check_branch
          %296 = sbr.rel (%p294) target = $region52
        $region51: #{tpu_custom_call.1} parent=39 // pred_region
          %298 = dma.done [#allocation6], 64
        $region52: #{tpu_custom_call.1} parent=39 // pred_fallthru
          _
        %s299 = sand.u32 %s24, 1
        %s300 = scalar_lea.sflag [#allocation9], %s299
        %s301 = sand.u32 %s112, 1
        %s302 = smul.addr %s301, 1024
        %s303 = scalar_lea.vmem [#allocation8], %s302
        // Predicated region
        $region53: #{tpu_custom_call.1} parent=39 // pred_check
          %p304 = pneg %p125
        $region54: #{tpu_custom_call.1} parent=39 // pred_check_branch
          %306 = sbr.rel (%p304) target = $region56
        $region55: #{tpu_custom_call.1} parent=39 // pred_region
          %308 = dma.done %s300, 16384
        $region56: #{tpu_custom_call.1} parent=39 // pred_fallthru
          _
        %s309 = sand.u32 %s24, 1
        %s310 = scalar_lea.sflag [#allocation9], %s309
        %s311 = sand.u32 %s138, 1
        %s312 = smul.addr %s311, 4
        %s313 = scalar_lea.vmem [#allocation10], %s312
        // Predicated region
        $region57: #{tpu_custom_call.1} parent=39 // pred_check
          %p314 = pneg %p151
        $region58: #{tpu_custom_call.1} parent=39 // pred_check_branch
          %316 = sbr.rel (%p314) target = $region60
        $region59: #{tpu_custom_call.1} parent=39 // pred_region
          %318 = dma.done %s310, 64
        $region60: #{tpu_custom_call.1} parent=39 // pred_fallthru
          _
        %p319 = pneg %p57
        %p320 = pneg %p54
        %p321 = pneg %p78
        %p322 = pneg %p75
        %p323 = pneg %p99
        %p324 = pneg %p96
        %s325 = sand.u32 %s24, 1
        %s326 = scalar_lea.sflag [#allocation9], %s325
        %s327 = sand.u32 %s112, 1
        %s328 = smul.addr %s327, 1024
        %s329 = scalar_lea.vmem [#allocation8], %s328
        %p330 = pneg %p125
        %p331 = pneg %p122
        %s332 = sand.u32 %s24, 1
        %s333 = scalar_lea.sflag [#allocation9], %s332
        %s334 = sand.u32 %s138, 1
        %s335 = smul.addr %s334, 4
        %s336 = scalar_lea.vmem [#allocation10], %s335
        %p337 = pneg %p151
        %p338 = pneg %p148
        %p339 = pneg %p179
        %p340 = pneg %p176
        %s341 = sand.u32 %s166, 1
        %s342 = scalar_lea.sflag [#allocation4], %s341
        %s343 = sand.u32 %s166, 1
        %s344 = smul.addr %s343, 32
        %s345 = scalar_lea.vmem [#allocation11], %s344
        %s346 = smul.u32 4, %s28
        %s347 = smul.u32 4, %s28
        %s348 = smul.u32 4, %s28
        %v350 = vld [vmem:[#allocation2] sm:$0xf]
        %v351 = vld [vmem:[#allocation5] sm:$0xff]
        %v352 = vld [vmem:[#allocation5 + $0x8] sm:$0xff]
        %v353 = vld [vmem:[#allocation7] sm:$0xf]
        %v355 = vperm.slane %v353, 0
        %v356 = vperm.slane %v353, 1
        %v357 = vperm.slane %v353, 2
        %v358 = vperm.slane %v353, 3
        %v365 = vunpack.c.l.b16 %v351
        %v366 = vunpack.c.h.b16 %v351
        %v367 = vunpack.c.l.b16 %v352
        %v368 = vunpack.c.h.b16 %v352
        %v369 = vpack.c.b16 %v365, %v365
        %v370 = vpack.c.b16 %v366, %v366
        %v371 = vpack.c.b16 %v367, %v367
        %v372 = vpack.c.b16 %v368, %v368
        %vm373 = vcmask 64512
        %v375 = vsel %vm373, %v350, 0
        %vm377 = vcmask 1043456
        %v379 = vsel %vm377, %v369, 0
        %v382 = vsel %vm377, %v370, 0
        %v385 = vsel %vm377, %v371, 0
        %v388 = vsel %vm377, %v372, 0
        %390 = vmatpush.bf16.msra.mxu0 0
        %391 = vmatpush.bf16.msra.mxu0 0
        %392 = vmatpush.bf16.msra.mxu0 0
        %393 = vmatpush.bf16.msra.mxu0 0
        %394 = vmatpush.bf16.msra.mxu0 0
        %395 = vmatpush.bf16.msra.mxu0 0
        %396 = vmatpush.bf16.msra.mxu0 0
        %397 = vmatpush.bf16.msra.mxu0 %v379
        %398 = vmatmul.bf16.gmra.mxu0 %v375
        %v399 = vpop.f32.mrf.mxu0
        %v400 = vadd.f32 %v355, %v399
        %v401 = vpop.f32.mrf.mxu0
        %402 = vdwg.mxu0
        %403 = vmatpush.bf16.msra.mxu0 0
        %404 = vmatpush.bf16.msra.mxu0 0
        %405 = vmatpush.bf16.msra.mxu0 0
        %406 = vmatpush.bf16.msra.mxu0 0
        %407 = vmatpush.bf16.msra.mxu0 0
        %408 = vmatpush.bf16.msra.mxu0 0
        %409 = vmatpush.bf16.msra.mxu0 0
        %410 = vmatpush.bf16.msra.mxu0 %v382
        %411 = vmatmul.bf16.gmra.mxu0 %v375
        %v412 = vpop.f32.mrf.mxu0
        %v413 = vadd.f32 %v356, %v412
        %v414 = vpop.f32.mrf.mxu0
        %415 = vdwg.mxu0
        %416 = vmatpush.bf16.msra.mxu0 0
        %417 = vmatpush.bf16.msra.mxu0 0
        %418 = vmatpush.bf16.msra.mxu0 0
        %419 = vmatpush.bf16.msra.mxu0 0
        %420 = vmatpush.bf16.msra.mxu0 0
        %421 = vmatpush.bf16.msra.mxu0 0
        %422 = vmatpush.bf16.msra.mxu0 0
        %423 = vmatpush.bf16.msra.mxu0 %v385
        %424 = vmatmul.bf16.gmra.mxu0 %v375
        %v425 = vpop.f32.mrf.mxu0
        %v426 = vadd.f32 %v357, %v425
        %v427 = vpop.f32.mrf.mxu0
        %428 = vdwg.mxu0
        %429 = vmatpush.bf16.msra.mxu0 0
        %430 = vmatpush.bf16.msra.mxu0 0
        %431 = vmatpush.bf16.msra.mxu0 0
        %432 = vmatpush.bf16.msra.mxu0 0
        %433 = vmatpush.bf16.msra.mxu0 0
        %434 = vmatpush.bf16.msra.mxu0 0
        %435 = vmatpush.bf16.msra.mxu0 0
        %436 = vmatpush.bf16.msra.mxu0 %v388
        %437 = vmatmul.bf16.gmra.mxu0 %v375
        %v438 = vpop.f32.mrf.mxu0
        %v439 = vadd.f32 %v358, %v438
        %v440 = vpop.f32.mrf.mxu0
        %441 = vdwg.mxu0
        %vm442 = vcmp.gt.f32.partialorder %v400, 0.0
        %vm443 = vcmp.gt.f32.partialorder %v413, 0.0
        %vm444 = vcmp.gt.f32.partialorder %v426, 0.0
        %vm445 = vcmp.gt.f32.partialorder %v439, 0.0
        %v446 = vmul.f32 %v400, 0.2
        %v447 = vmul.f32 %v413, 0.2
        %v448 = vmul.f32 %v426, 0.2
        %v449 = vmul.f32 %v439, 0.2
        %v450 = vsel %vm442, %v400, %v446
        %v451 = vsel %vm443, %v413, %v447
        %v452 = vsel %vm444, %v426, %v448
        %v453 = vsel %vm445, %v439, %v449
        %v454 = vpack.c.bf16 %v450, %v450
        %v455 = vpack.c.bf16 %v451, %v451
        %v456 = vpack.c.bf16 %v452, %v452
        %v457 = vpack.c.bf16 %v453, %v453
        %v458 = vld [vmem:[%s303] sm:$0xff]
        %v459 = vld [vmem:[%s303 + $0x8] sm:$0xff]
        %v460 = vld [vmem:[%s303 + $0x10] sm:$0xff]
        %v461 = vld [vmem:[%s303 + $0x18] sm:$0xff]
        %v462 = vld [vmem:[%s303 + $0x20] sm:$0xff]
        %v463 = vld [vmem:[%s303 + $0x28] sm:$0xff]
        %v464 = vld [vmem:[%s303 + $0x30] sm:$0xff]
        %v465 = vld [vmem:[%s303 + $0x38] sm:$0xff]
        %v466 = vld [vmem:[%s303 + $0x40] sm:$0xff]
        %v467 = vld [vmem:[%s303 + $0x48] sm:$0xff]
        %v468 = vld [vmem:[%s303 + $0x50] sm:$0xff]
        %v469 = vld [vmem:[%s303 + $0x58] sm:$0xff]
        %v470 = vld [vmem:[%s303 + $0x60] sm:$0xff]
        %v471 = vld [vmem:[%s303 + $0x68] sm:$0xff]
        %v472 = vld [vmem:[%s303 + $0x70] sm:$0xff]
        %v473 = vld [vmem:[%s303 + $0x78] sm:$0xff]
        %v474 = vld [vmem:[%s303 + $0x80] sm:$0xff]
        %v475 = vld [vmem:[%s303 + $0x88] sm:$0xff]
        %v476 = vld [vmem:[%s303 + $0x90] sm:$0xff]
        %v477 = vld [vmem:[%s303 + $0x98] sm:$0xff]
        %v478 = vld [vmem:[%s303 + $0xa0] sm:$0xff]
        %v479 = vld [vmem:[%s303 + $0xa8] sm:$0xff]
        %v480 = vld [vmem:[%s303 + $0xb0] sm:$0xff]
        %v481 = vld [vmem:[%s303 + $0xb8] sm:$0xff]
        %v482 = vld [vmem:[%s303 + $0xc0] sm:$0xff]
        %v483 = vld [vmem:[%s303 + $0xc8] sm:$0xff]
        %v484 = vld [vmem:[%s303 + $0xd0] sm:$0xff]
        %v485 = vld [vmem:[%s303 + $0xd8] sm:$0xff]
        %v486 = vld [vmem:[%s303 + $0xe0] sm:$0xff]
        %v487 = vld [vmem:[%s303 + $0xe8] sm:$0xff]
        %v488 = vld [vmem:[%s303 + $0xf0] sm:$0xff]
        %v489 = vld [vmem:[%s303 + $0xf8] sm:$0xff]
        %v490 = vld [vmem:[%s303 + $0x100] sm:$0xff]
        %v491 = vld [vmem:[%s303 + $0x108] sm:$0xff]
        %v492 = vld [vmem:[%s303 + $0x110] sm:$0xff]
        %v493 = vld [vmem:[%s303 + $0x118] sm:$0xff]
        %v494 = vld [vmem:[%s303 + $0x120] sm:$0xff]
        %v495 = vld [vmem:[%s303 + $0x128] sm:$0xff]
        %v496 = vld [vmem:[%s303 + $0x130] sm:$0xff]
        %v497 = vld [vmem:[%s303 + $0x138] sm:$0xff]
        %v498 = vld [vmem:[%s303 + $0x140] sm:$0xff]
        %v499 = vld [vmem:[%s303 + $0x148] sm:$0xff]
        %v500 = vld [vmem:[%s303 + $0x150] sm:$0xff]
        %v501 = vld [vmem:[%s303 + $0x158] sm:$0xff]
        %v502 = vld [vmem:[%s303 + $0x160] sm:$0xff]
        %v503 = vld [vmem:[%s303 + $0x168] sm:$0xff]
        %v504 = vld [vmem:[%s303 + $0x170] sm:$0xff]
        %v505 = vld [vmem:[%s303 + $0x178] sm:$0xff]
        %v506 = vld [vmem:[%s303 + $0x180] sm:$0xff]
        %v507 = vld [vmem:[%s303 + $0x188] sm:$0xff]
        %v508 = vld [vmem:[%s303 + $0x190] sm:$0xff]
        %v509 = vld [vmem:[%s303 + $0x198] sm:$0xff]
        %v510 = vld [vmem:[%s303 + $0x1a0] sm:$0xff]
        %v511 = vld [vmem:[%s303 + $0x1a8] sm:$0xff]
        %v512 = vld [vmem:[%s303 + $0x1b0] sm:$0xff]
        %v513 = vld [vmem:[%s303 + $0x1b8] sm:$0xff]
        %v514 = vld [vmem:[%s303 + $0x1c0] sm:$0xff]
        %v515 = vld [vmem:[%s303 + $0x1c8] sm:$0xff]
        %v516 = vld [vmem:[%s303 + $0x1d0] sm:$0xff]
        %v517 = vld [vmem:[%s303 + $0x1d8] sm:$0xff]
        %v518 = vld [vmem:[%s303 + $0x1e0] sm:$0xff]
        %v519 = vld [vmem:[%s303 + $0x1e8] sm:$0xff]
        %v520 = vld [vmem:[%s303 + $0x1f0] sm:$0xff]
        %v521 = vld [vmem:[%s303 + $0x1f8] sm:$0xff]
        %v522 = vld [vmem:[%s303 + $0x200] sm:$0xff]
        %v523 = vld [vmem:[%s303 + $0x208] sm:$0xff]
        %v524 = vld [vmem:[%s303 + $0x210] sm:$0xff]
        %v525 = vld [vmem:[%s303 + $0x218] sm:$0xff]
        %v526 = vld [vmem:[%s303 + $0x220] sm:$0xff]
        %v527 = vld [vmem:[%s303 + $0x228] sm:$0xff]
        %v528 = vld [vmem:[%s303 + $0x230] sm:$0xff]
        %v529 = vld [vmem:[%s303 + $0x238] sm:$0xff]
        %v530 = vld [vmem:[%s303 + $0x240] sm:$0xff]
        %v531 = vld [vmem:[%s303 + $0x248] sm:$0xff]
        %v532 = vld [vmem:[%s303 + $0x250] sm:$0xff]
        %v533 = vld [vmem:[%s303 + $0x258] sm:$0xff]
        %v534 = vld [vmem:[%s303 + $0x260] sm:$0xff]
        %v535 = vld [vmem:[%s303 + $0x268] sm:$0xff]
        %v536 = vld [vmem:[%s303 + $0x270] sm:$0xff]
        %v537 = vld [vmem:[%s303 + $0x278] sm:$0xff]
        %v538 = vld [vmem:[%s303 + $0x280] sm:$0xff]
        %v539 = vld [vmem:[%s303 + $0x288] sm:$0xff]
        %v540 = vld [vmem:[%s303 + $0x290] sm:$0xff]
        %v541 = vld [vmem:[%s303 + $0x298] sm:$0xff]
        %v542 = vld [vmem:[%s303 + $0x2a0] sm:$0xff]
        %v543 = vld [vmem:[%s303 + $0x2a8] sm:$0xff]
        %v544 = vld [vmem:[%s303 + $0x2b0] sm:$0xff]
        %v545 = vld [vmem:[%s303 + $0x2b8] sm:$0xff]
        %v546 = vld [vmem:[%s303 + $0x2c0] sm:$0xff]
        %v547 = vld [vmem:[%s303 + $0x2c8] sm:$0xff]
        %v548 = vld [vmem:[%s303 + $0x2d0] sm:$0xff]
        %v549 = vld [vmem:[%s303 + $0x2d8] sm:$0xff]
        %v550 = vld [vmem:[%s303 + $0x2e0] sm:$0xff]
        %v551 = vld [vmem:[%s303 + $0x2e8] sm:$0xff]
        %v552 = vld [vmem:[%s303 + $0x2f0] sm:$0xff]
        %v553 = vld [vmem:[%s303 + $0x2f8] sm:$0xff]
        %v554 = vld [vmem:[%s303 + $0x300] sm:$0xff]
        %v555 = vld [vmem:[%s303 + $0x308] sm:$0xff]
        %v556 = vld [vmem:[%s303 + $0x310] sm:$0xff]
        %v557 = vld [vmem:[%s303 + $0x318] sm:$0xff]
        %v558 = vld [vmem:[%s303 + $0x320] sm:$0xff]
        %v559 = vld [vmem:[%s303 + $0x328] sm:$0xff]
        %v560 = vld [vmem:[%s303 + $0x330] sm:$0xff]
        %v561 = vld [vmem:[%s303 + $0x338] sm:$0xff]
        %v562 = vld [vmem:[%s303 + $0x340] sm:$0xff]
        %v563 = vld [vmem:[%s303 + $0x348] sm:$0xff]
        %v564 = vld [vmem:[%s303 + $0x350] sm:$0xff]
        %v565 = vld [vmem:[%s303 + $0x358] sm:$0xff]
        %v566 = vld [vmem:[%s303 + $0x360] sm:$0xff]
        %v567 = vld [vmem:[%s303 + $0x368] sm:$0xff]
        %v568 = vld [vmem:[%s303 + $0x370] sm:$0xff]
        %v569 = vld [vmem:[%s303 + $0x378] sm:$0xff]
        %v570 = vld [vmem:[%s303 + $0x380] sm:$0xff]
        %v571 = vld [vmem:[%s303 + $0x388] sm:$0xff]
        %v572 = vld [vmem:[%s303 + $0x390] sm:$0xff]
        %v573 = vld [vmem:[%s303 + $0x398] sm:$0xff]
        %v574 = vld [vmem:[%s303 + $0x3a0] sm:$0xff]
        %v575 = vld [vmem:[%s303 + $0x3a8] sm:$0xff]
        %v576 = vld [vmem:[%s303 + $0x3b0] sm:$0xff]
        %v577 = vld [vmem:[%s303 + $0x3b8] sm:$0xff]
        %v578 = vld [vmem:[%s303 + $0x3c0] sm:$0xff]
        %v579 = vld [vmem:[%s303 + $0x3c8] sm:$0xff]
        %v580 = vld [vmem:[%s303 + $0x3d0] sm:$0xff]
        %v581 = vld [vmem:[%s303 + $0x3d8] sm:$0xff]
        %v582 = vld [vmem:[%s303 + $0x3e0] sm:$0xff]
        %v583 = vld [vmem:[%s303 + $0x3e8] sm:$0xff]
        %v584 = vld [vmem:[%s303 + $0x3f0] sm:$0xff]
        %v585 = vld [vmem:[%s303 + $0x3f8] sm:$0xff]
        %v586 = vld [vmem:[%s313] sm:$0xf]
        %v588 = vperm.slane %v586, 0
        %v589 = vperm.slane %v586, 1
        %v590 = vperm.slane %v586, 2
        %v591 = vperm.slane %v586, 3
        %v724 = vunpack.c.l.b16 %v458
        %v725 = vunpack.c.h.b16 %v458
        %v726 = vunpack.c.l.b16 %v459
        %v727 = vunpack.c.h.b16 %v459
        %v728 = vunpack.c.l.b16 %v460
        %v729 = vunpack.c.h.b16 %v460
        %v730 = vunpack.c.l.b16 %v461
        %v731 = vunpack.c.h.b16 %v461
        %v732 = vunpack.c.l.b16 %v462
        %v733 = vunpack.c.h.b16 %v462
        %v734 = vunpack.c.l.b16 %v463
        %v735 = vunpack.c.h.b16 %v463
        %v736 = vunpack.c.l.b16 %v464
        %v737 = vunpack.c.h.b16 %v464
        %v738 = vunpack.c.l.b16 %v465
        %v739 = vunpack.c.h.b16 %v465
        %v740 = vunpack.c.l.b16 %v466
        %v741 = vunpack.c.h.b16 %v466
        %v742 = vunpack.c.l.b16 %v467
        %v743 = vunpack.c.h.b16 %v467
        %v744 = vunpack.c.l.b16 %v468
        %v745 = vunpack.c.h.b16 %v468
        %v746 = vunpack.c.l.b16 %v469
        %v747 = vunpack.c.h.b16 %v469
        %v748 = vunpack.c.l.b16 %v470
        %v749 = vunpack.c.h.b16 %v470
        %v750 = vunpack.c.l.b16 %v471
        %v751 = vunpack.c.h.b16 %v471
        %v752 = vunpack.c.l.b16 %v472
        %v753 = vunpack.c.h.b16 %v472
        %v754 = vunpack.c.l.b16 %v473
        %v755 = vunpack.c.h.b16 %v473
        %v756 = vunpack.c.l.b16 %v474
        %v757 = vunpack.c.h.b16 %v474
        %v758 = vunpack.c.l.b16 %v475
        %v759 = vunpack.c.h.b16 %v475
        %v760 = vunpack.c.l.b16 %v476
        %v761 = vunpack.c.h.b16 %v476
        %v762 = vunpack.c.l.b16 %v477
        %v763 = vunpack.c.h.b16 %v477
        %v764 = vunpack.c.l.b16 %v478
        %v765 = vunpack.c.h.b16 %v478
        %v766 = vunpack.c.l.b16 %v479
        %v767 = vunpack.c.h.b16 %v479
        %v768 = vunpack.c.l.b16 %v480
        %v769 = vunpack.c.h.b16 %v480
        %v770 = vunpack.c.l.b16 %v481
        %v771 = vunpack.c.h.b16 %v481
        %v772 = vunpack.c.l.b16 %v482
        %v773 = vunpack.c.h.b16 %v482
        %v774 = vunpack.c.l.b16 %v483
        %v775 = vunpack.c.h.b16 %v483
        %v776 = vunpack.c.l.b16 %v484
        %v777 = vunpack.c.h.b16 %v484
        %v778 = vunpack.c.l.b16 %v485
        %v779 = vunpack.c.h.b16 %v485
        %v780 = vunpack.c.l.b16 %v486
        %v781 = vunpack.c.h.b16 %v486
        %v782 = vunpack.c.l.b16 %v487
        %v783 = vunpack.c.h.b16 %v487
        %v784 = vunpack.c.l.b16 %v488
        %v785 = vunpack.c.h.b16 %v488
        %v786 = vunpack.c.l.b16 %v489
        %v787 = vunpack.c.h.b16 %v489
        %v788 = vunpack.c.l.b16 %v490
        %v789 = vunpack.c.h.b16 %v490
        %v790 = vunpack.c.l.b16 %v491
        %v791 = vunpack.c.h.b16 %v491
        %v792 = vunpack.c.l.b16 %v492
        %v793 = vunpack.c.h.b16 %v492
        %v794 = vunpack.c.l.b16 %v493
        %v795 = vunpack.c.h.b16 %v493
        %v796 = vunpack.c.l.b16 %v494
        %v797 = vunpack.c.h.b16 %v494
        %v798 = vunpack.c.l.b16 %v495
        %v799 = vunpack.c.h.b16 %v495
        %v800 = vunpack.c.l.b16 %v496
        %v801 = vunpack.c.h.b16 %v496
        %v802 = vunpack.c.l.b16 %v497
        %v803 = vunpack.c.h.b16 %v497
        %v804 = vunpack.c.l.b16 %v498
        %v805 = vunpack.c.h.b16 %v498
        %v806 = vunpack.c.l.b16 %v499
        %v807 = vunpack.c.h.b16 %v499
        %v808 = vunpack.c.l.b16 %v500
        %v809 = vunpack.c.h.b16 %v500
        %v810 = vunpack.c.l.b16 %v501
        %v811 = vunpack.c.h.b16 %v501
        %v812 = vunpack.c.l.b16 %v502
        %v813 = vunpack.c.h.b16 %v502
        %v814 = vunpack.c.l.b16 %v503
        %v815 = vunpack.c.h.b16 %v503
        %v816 = vunpack.c.l.b16 %v504
        %v817 = vunpack.c.h.b16 %v504
        %v818 = vunpack.c.l.b16 %v505
        %v819 = vunpack.c.h.b16 %v505
        %v820 = vunpack.c.l.b16 %v506
        %v821 = vunpack.c.h.b16 %v506
        %v822 = vunpack.c.l.b16 %v507
        %v823 = vunpack.c.h.b16 %v507
        %v824 = vunpack.c.l.b16 %v508
        %v825 = vunpack.c.h.b16 %v508
        %v826 = vunpack.c.l.b16 %v509
        %v827 = vunpack.c.h.b16 %v509
        %v828 = vunpack.c.l.b16 %v510
        %v829 = vunpack.c.h.b16 %v510
        %v830 = vunpack.c.l.b16 %v511
        %v831 = vunpack.c.h.b16 %v511
        %v832 = vunpack.c.l.b16 %v512
        %v833 = vunpack.c.h.b16 %v512
        %v834 = vunpack.c.l.b16 %v513
        %v835 = vunpack.c.h.b16 %v513
        %v836 = vunpack.c.l.b16 %v514
        %v837 = vunpack.c.h.b16 %v514
        %v838 = vunpack.c.l.b16 %v515
        %v839 = vunpack.c.h.b16 %v515
        %v840 = vunpack.c.l.b16 %v516
        %v841 = vunpack.c.h.b16 %v516
        %v842 = vunpack.c.l.b16 %v517
        %v843 = vunpack.c.h.b16 %v517
        %v844 = vunpack.c.l.b16 %v518
        %v845 = vunpack.c.h.b16 %v518
        %v846 = vunpack.c.l.b16 %v519
        %v847 = vunpack.c.h.b16 %v519
        %v848 = vunpack.c.l.b16 %v520
        %v849 = vunpack.c.h.b16 %v520
        %v850 = vunpack.c.l.b16 %v521
        %v851 = vunpack.c.h.b16 %v521
        %v852 = vunpack.c.l.b16 %v522
        %v853 = vunpack.c.h.b16 %v522
        %v854 = vunpack.c.l.b16 %v523
        %v855 = vunpack.c.h.b16 %v523
        %v856 = vunpack.c.l.b16 %v524
        %v857 = vunpack.c.h.b16 %v524
        %v858 = vunpack.c.l.b16 %v525
        %v859 = vunpack.c.h.b16 %v525
        %v860 = vunpack.c.l.b16 %v526
        %v861 = vunpack.c.h.b16 %v526
        %v862 = vunpack.c.l.b16 %v527
        %v863 = vunpack.c.h.b16 %v527
        %v864 = vunpack.c.l.b16 %v528
        %v865 = vunpack.c.h.b16 %v528
        %v866 = vunpack.c.l.b16 %v529
        %v867 = vunpack.c.h.b16 %v529
        %v868 = vunpack.c.l.b16 %v530
        %v869 = vunpack.c.h.b16 %v530
        %v870 = vunpack.c.l.b16 %v531
        %v871 = vunpack.c.h.b16 %v531
        %v872 = vunpack.c.l.b16 %v532
        %v873 = vunpack.c.h.b16 %v532
        %v874 = vunpack.c.l.b16 %v533
        %v875 = vunpack.c.h.b16 %v533
        %v876 = vunpack.c.l.b16 %v534
        %v877 = vunpack.c.h.b16 %v534
        %v878 = vunpack.c.l.b16 %v535
        %v879 = vunpack.c.h.b16 %v535
        %v880 = vunpack.c.l.b16 %v536
        %v881 = vunpack.c.h.b16 %v536
        %v882 = vunpack.c.l.b16 %v537
        %v883 = vunpack.c.h.b16 %v537
        %v884 = vunpack.c.l.b16 %v538
        %v885 = vunpack.c.h.b16 %v538
        %v886 = vunpack.c.l.b16 %v539
        %v887 = vunpack.c.h.b16 %v539
        %v888 = vunpack.c.l.b16 %v540
        %v889 = vunpack.c.h.b16 %v540
        %v890 = vunpack.c.l.b16 %v541
        %v891 = vunpack.c.h.b16 %v541
        %v892 = vunpack.c.l.b16 %v542
        %v893 = vunpack.c.h.b16 %v542
        %v894 = vunpack.c.l.b16 %v543
        %v895 = vunpack.c.h.b16 %v543
        %v896 = vunpack.c.l.b16 %v544
        %v897 = vunpack.c.h.b16 %v544
        %v898 = vunpack.c.l.b16 %v545
        %v899 = vunpack.c.h.b16 %v545
        %v900 = vunpack.c.l.b16 %v546
        %v901 = vunpack.c.h.b16 %v546
        %v902 = vunpack.c.l.b16 %v547
        %v903 = vunpack.c.h.b16 %v547
        %v904 = vunpack.c.l.b16 %v548
        %v905 = vunpack.c.h.b16 %v548
        %v906 = vunpack.c.l.b16 %v549
        %v907 = vunpack.c.h.b16 %v549
        %v908 = vunpack.c.l.b16 %v550
        %v909 = vunpack.c.h.b16 %v550
        %v910 = vunpack.c.l.b16 %v551
        %v911 = vunpack.c.h.b16 %v551
        %v912 = vunpack.c.l.b16 %v552
        %v913 = vunpack.c.h.b16 %v552
        %v914 = vunpack.c.l.b16 %v553
        %v915 = vunpack.c.h.b16 %v553
        %v916 = vunpack.c.l.b16 %v554
        %v917 = vunpack.c.h.b16 %v554
        %v918 = vunpack.c.l.b16 %v555
        %v919 = vunpack.c.h.b16 %v555
        %v920 = vunpack.c.l.b16 %v556
        %v921 = vunpack.c.h.b16 %v556
        %v922 = vunpack.c.l.b16 %v557
        %v923 = vunpack.c.h.b16 %v557
        %v924 = vunpack.c.l.b16 %v558
        %v925 = vunpack.c.h.b16 %v558
        %v926 = vunpack.c.l.b16 %v559
        %v927 = vunpack.c.h.b16 %v559
        %v928 = vunpack.c.l.b16 %v560
        %v929 = vunpack.c.h.b16 %v560
        %v930 = vunpack.c.l.b16 %v561
        %v931 = vunpack.c.h.b16 %v561
        %v932 = vunpack.c.l.b16 %v562
        %v933 = vunpack.c.h.b16 %v562
        %v934 = vunpack.c.l.b16 %v563
        %v935 = vunpack.c.h.b16 %v563
        %v936 = vunpack.c.l.b16 %v564
        %v937 = vunpack.c.h.b16 %v564
        %v938 = vunpack.c.l.b16 %v565
        %v939 = vunpack.c.h.b16 %v565
        %v940 = vunpack.c.l.b16 %v566
        %v941 = vunpack.c.h.b16 %v566
        %v942 = vunpack.c.l.b16 %v567
        %v943 = vunpack.c.h.b16 %v567
        %v944 = vunpack.c.l.b16 %v568
        %v945 = vunpack.c.h.b16 %v568
        %v946 = vunpack.c.l.b16 %v569
        %v947 = vunpack.c.h.b16 %v569
        %v948 = vunpack.c.l.b16 %v570
        %v949 = vunpack.c.h.b16 %v570
        %v950 = vunpack.c.l.b16 %v571
        %v951 = vunpack.c.h.b16 %v571
        %v952 = vunpack.c.l.b16 %v572
        %v953 = vunpack.c.h.b16 %v572
        %v954 = vunpack.c.l.b16 %v573
        %v955 = vunpack.c.h.b16 %v573
        %v956 = vunpack.c.l.b16 %v574
        %v957 = vunpack.c.h.b16 %v574
        %v958 = vunpack.c.l.b16 %v575
        %v959 = vunpack.c.h.b16 %v575
        %v960 = vunpack.c.l.b16 %v576
        %v961 = vunpack.c.h.b16 %v576
        %v962 = vunpack.c.l.b16 %v577
        %v963 = vunpack.c.h.b16 %v577
        %v964 = vunpack.c.l.b16 %v578
        %v965 = vunpack.c.h.b16 %v578
        %v966 = vunpack.c.l.b16 %v579
        %v967 = vunpack.c.h.b16 %v579
        %v968 = vunpack.c.l.b16 %v580
        %v969 = vunpack.c.h.b16 %v580
        %v970 = vunpack.c.l.b16 %v581
        %v971 = vunpack.c.h.b16 %v581
        %v972 = vunpack.c.l.b16 %v582
        %v973 = vunpack.c.h.b16 %v582
        %v974 = vunpack.c.l.b16 %v583
        %v975 = vunpack.c.h.b16 %v583
        %v976 = vunpack.c.l.b16 %v584
        %v977 = vunpack.c.h.b16 %v584
        %v978 = vunpack.c.l.b16 %v585
        %v979 = vunpack.c.h.b16 %v585
        %v980 = vpack.c.b16 %v728, %v724
        %v981 = vpack.c.b16 %v729, %v725
        %v982 = vpack.c.b16 %v730, %v726
        %v983 = vpack.c.b16 %v731, %v727
        %v984 = vpack.c.b16 %v736, %v732
        %v985 = vpack.c.b16 %v737, %v733
        %v986 = vpack.c.b16 %v738, %v734
        %v987 = vpack.c.b16 %v739, %v735
        %v988 = vpack.c.b16 %v744, %v740
        %v989 = vpack.c.b16 %v745, %v741
        %v990 = vpack.c.b16 %v746, %v742
        %v991 = vpack.c.b16 %v747, %v743
        %v992 = vpack.c.b16 %v752, %v748
        %v993 = vpack.c.b16 %v753, %v749
        %v994 = vpack.c.b16 %v754, %v750
        %v995 = vpack.c.b16 %v755, %v751
        %v996 = vpack.c.b16 %v760, %v756
        %v997 = vpack.c.b16 %v761, %v757
        %v998 = vpack.c.b16 %v762, %v758
        %v999 = vpack.c.b16 %v763, %v759
        %v1000 = vpack.c.b16 %v768, %v764
        %v1001 = vpack.c.b16 %v769, %v765
        %v1002 = vpack.c.b16 %v770, %v766
        %v1003 = vpack.c.b16 %v771, %v767
        %v1004 = vpack.c.b16 %v776, %v772
        %v1005 = vpack.c.b16 %v777, %v773
        %v1006 = vpack.c.b16 %v778, %v774
        %v1007 = vpack.c.b16 %v779, %v775
        %v1008 = vpack.c.b16 %v784, %v780
        %v1009 = vpack.c.b16 %v785, %v781
        %v1010 = vpack.c.b16 %v786, %v782
        %v1011 = vpack.c.b16 %v787, %v783
        %v1012 = vpack.c.b16 %v792, %v788
        %v1013 = vpack.c.b16 %v793, %v789
        %v1014 = vpack.c.b16 %v794, %v790
        %v1015 = vpack.c.b16 %v795, %v791
        %v1016 = vpack.c.b16 %v800, %v796
        %v1017 = vpack.c.b16 %v801, %v797
        %v1018 = vpack.c.b16 %v802, %v798
        %v1019 = vpack.c.b16 %v803, %v799
        %v1020 = vpack.c.b16 %v808, %v804
        %v1021 = vpack.c.b16 %v809, %v805
        %v1022 = vpack.c.b16 %v810, %v806
        %v1023 = vpack.c.b16 %v811, %v807
        %v1024 = vpack.c.b16 %v816, %v812
        %v1025 = vpack.c.b16 %v817, %v813
        %v1026 = vpack.c.b16 %v818, %v814
        %v1027 = vpack.c.b16 %v819, %v815
        %v1028 = vpack.c.b16 %v824, %v820
        %v1029 = vpack.c.b16 %v825, %v821
        %v1030 = vpack.c.b16 %v826, %v822
        %v1031 = vpack.c.b16 %v827, %v823
        %v1032 = vpack.c.b16 %v832, %v828
        %v1033 = vpack.c.b16 %v833, %v829
        %v1034 = vpack.c.b16 %v834, %v830
        %v1035 = vpack.c.b16 %v835, %v831
        %v1036 = vpack.c.b16 %v840, %v836
        %v1037 = vpack.c.b16 %v841, %v837
        %v1038 = vpack.c.b16 %v842, %v838
        %v1039 = vpack.c.b16 %v843, %v839
        %v1040 = vpack.c.b16 %v848, %v844
        %v1041 = vpack.c.b16 %v849, %v845
        %v1042 = vpack.c.b16 %v850, %v846
        %v1043 = vpack.c.b16 %v851, %v847
        %v1044 = vpack.c.b16 %v856, %v852
        %v1045 = vpack.c.b16 %v857, %v853
        %v1046 = vpack.c.b16 %v858, %v854
        %v1047 = vpack.c.b16 %v859, %v855
        %v1048 = vpack.c.b16 %v864, %v860
        %v1049 = vpack.c.b16 %v865, %v861
        %v1050 = vpack.c.b16 %v866, %v862
        %v1051 = vpack.c.b16 %v867, %v863
        %v1052 = vpack.c.b16 %v872, %v868
        %v1053 = vpack.c.b16 %v873, %v869
        %v1054 = vpack.c.b16 %v874, %v870
        %v1055 = vpack.c.b16 %v875, %v871
        %v1056 = vpack.c.b16 %v880, %v876
        %v1057 = vpack.c.b16 %v881, %v877
        %v1058 = vpack.c.b16 %v882, %v878
        %v1059 = vpack.c.b16 %v883, %v879
        %v1060 = vpack.c.b16 %v888, %v884
        %v1061 = vpack.c.b16 %v889, %v885
        %v1062 = vpack.c.b16 %v890, %v886
        %v1063 = vpack.c.b16 %v891, %v887
        %v1064 = vpack.c.b16 %v896, %v892
        %v1065 = vpack.c.b16 %v897, %v893
        %v1066 = vpack.c.b16 %v898, %v894
        %v1067 = vpack.c.b16 %v899, %v895
        %v1068 = vpack.c.b16 %v904, %v900
        %v1069 = vpack.c.b16 %v905, %v901
        %v1070 = vpack.c.b16 %v906, %v902
        %v1071 = vpack.c.b16 %v907, %v903
        %v1072 = vpack.c.b16 %v912, %v908
        %v1073 = vpack.c.b16 %v913, %v909
        %v1074 = vpack.c.b16 %v914, %v910
        %v1075 = vpack.c.b16 %v915, %v911
        %v1076 = vpack.c.b16 %v920, %v916
        %v1077 = vpack.c.b16 %v921, %v917
        %v1078 = vpack.c.b16 %v922, %v918
        %v1079 = vpack.c.b16 %v923, %v919
        %v1080 = vpack.c.b16 %v928, %v924
        %v1081 = vpack.c.b16 %v929, %v925
        %v1082 = vpack.c.b16 %v930, %v926
        %v1083 = vpack.c.b16 %v931, %v927
        %v1084 = vpack.c.b16 %v936, %v932
        %v1085 = vpack.c.b16 %v937, %v933
        %v1086 = vpack.c.b16 %v938, %v934
        %v1087 = vpack.c.b16 %v939, %v935
        %v1088 = vpack.c.b16 %v944, %v940
        %v1089 = vpack.c.b16 %v945, %v941
        %v1090 = vpack.c.b16 %v946, %v942
        %v1091 = vpack.c.b16 %v947, %v943
        %v1092 = vpack.c.b16 %v952, %v948
        %v1093 = vpack.c.b16 %v953, %v949
        %v1094 = vpack.c.b16 %v954, %v950
        %v1095 = vpack.c.b16 %v955, %v951
        %v1096 = vpack.c.b16 %v960, %v956
        %v1097 = vpack.c.b16 %v961, %v957
        %v1098 = vpack.c.b16 %v962, %v958
        %v1099 = vpack.c.b16 %v963, %v959
        %v1100 = vpack.c.b16 %v968, %v964
        %v1101 = vpack.c.b16 %v969, %v965
        %v1102 = vpack.c.b16 %v970, %v966
        %v1103 = vpack.c.b16 %v971, %v967
        %v1104 = vpack.c.b16 %v976, %v972
        %v1105 = vpack.c.b16 %v977, %v973
        %v1106 = vpack.c.b16 %v978, %v974
        %v1107 = vpack.c.b16 %v979, %v975
        %1236 = vmatpush.bf16.msra.mxu0 %v1008
        %1237 = vmatpush.bf16.msra.mxu0 %v1004
        %1238 = vmatpush.bf16.msra.mxu0 %v1000
        %1239 = vmatpush.bf16.msra.mxu0 %v996
        %1240 = vmatpush.bf16.msra.mxu0 %v992
        %1241 = vmatpush.bf16.msra.mxu0 %v988
        %1242 = vmatpush.bf16.msra.mxu0 %v984
        %1243 = vmatpush.bf16.msra.mxu0 %v980
        %1244 = vmatmul.bf16.gmra.mxu0 %v454
        %v1245 = vpop.f32.mrf.mxu0
        %v1246 = vadd.f32 %v588, %v1245
        %v1247 = vpop.f32.mrf.mxu0
        %1248 = vdwg.mxu0
        %1249 = vmatpush.bf16.msra.mxu0 %v1040
        %1250 = vmatpush.bf16.msra.mxu0 %v1036
        %1251 = vmatpush.bf16.msra.mxu0 %v1032
        %1252 = vmatpush.bf16.msra.mxu0 %v1028
        %1253 = vmatpush.bf16.msra.mxu0 %v1024
        %1254 = vmatpush.bf16.msra.mxu0 %v1020
        %1255 = vmatpush.bf16.msra.mxu0 %v1016
        %1256 = vmatpush.bf16.msra.mxu0 %v1012
        %1257 = vmatmul.bf16.gmra.mxu0 %v455
        %v1258 = vpop.f32.mrf.mxu0
        %v1259 = vadd.f32 %v1246, %v1258
        %v1260 = vpop.f32.mrf.mxu0
        %1261 = vdwg.mxu0
        %1262 = vmatpush.bf16.msra.mxu0 %v1072
        %1263 = vmatpush.bf16.msra.mxu0 %v1068
        %1264 = vmatpush.bf16.msra.mxu0 %v1064
        %1265 = vmatpush.bf16.msra.mxu0 %v1060
        %1266 = vmatpush.bf16.msra.mxu0 %v1056
        %1267 = vmatpush.bf16.msra.mxu0 %v1052
        %1268 = vmatpush.bf16.msra.mxu0 %v1048
        %1269 = vmatpush.bf16.msra.mxu0 %v1044
        %1270 = vmatmul.bf16.gmra.mxu0 %v456
        %v1271 = vpop.f32.mrf.mxu0
        %v1272 = vadd.f32 %v1259, %v1271
        %v1273 = vpop.f32.mrf.mxu0
        %1274 = vdwg.mxu0
        %1275 = vmatpush.bf16.msra.mxu0 %v1104
        %1276 = vmatpush.bf16.msra.mxu0 %v1100
        %1277 = vmatpush.bf16.msra.mxu0 %v1096
        %1278 = vmatpush.bf16.msra.mxu0 %v1092
        %1279 = vmatpush.bf16.msra.mxu0 %v1088
        %1280 = vmatpush.bf16.msra.mxu0 %v1084
        %1281 = vmatpush.bf16.msra.mxu0 %v1080
        %1282 = vmatpush.bf16.msra.mxu0 %v1076
        %1283 = vmatmul.bf16.gmra.mxu0 %v457
        %v1284 = vpop.f32.mrf.mxu0
        %v1285 = vadd.f32 %v1272, %v1284
        %v1286 = vpop.f32.mrf.mxu0
        %1287 = vdwg.mxu0
        %1288 = vmatpush.bf16.msra.mxu0 %v1009
        %1289 = vmatpush.bf16.msra.mxu0 %v1005
        %1290 = vmatpush.bf16.msra.mxu0 %v1001
        %1291 = vmatpush.bf16.msra.mxu0 %v997
        %1292 = vmatpush.bf16.msra.mxu0 %v993
        %1293 = vmatpush.bf16.msra.mxu0 %v989
        %1294 = vmatpush.bf16.msra.mxu0 %v985
        %1295 = vmatpush.bf16.msra.mxu0 %v981
        %1296 = vmatmul.bf16.gmra.mxu0 %v454
        %v1297 = vpop.f32.mrf.mxu0
        %v1298 = vadd.f32 %v589, %v1297
        %v1299 = vpop.f32.mrf.mxu0
        %1300 = vdwg.mxu0
        %1301 = vmatpush.bf16.msra.mxu0 %v1041
        %1302 = vmatpush.bf16.msra.mxu0 %v1037
        %1303 = vmatpush.bf16.msra.mxu0 %v1033
        %1304 = vmatpush.bf16.msra.mxu0 %v1029
        %1305 = vmatpush.bf16.msra.mxu0 %v1025
        %1306 = vmatpush.bf16.msra.mxu0 %v1021
        %1307 = vmatpush.bf16.msra.mxu0 %v1017
        %1308 = vmatpush.bf16.msra.mxu0 %v1013
        %1309 = vmatmul.bf16.gmra.mxu0 %v455
        %v1310 = vpop.f32.mrf.mxu0
        %v1311 = vadd.f32 %v1298, %v1310
        %v1312 = vpop.f32.mrf.mxu0
        %1313 = vdwg.mxu0
        %1314 = vmatpush.bf16.msra.mxu0 %v1073
        %1315 = vmatpush.bf16.msra.mxu0 %v1069
        %1316 = vmatpush.bf16.msra.mxu0 %v1065
        %1317 = vmatpush.bf16.msra.mxu0 %v1061
        %1318 = vmatpush.bf16.msra.mxu0 %v1057
        %1319 = vmatpush.bf16.msra.mxu0 %v1053
        %1320 = vmatpush.bf16.msra.mxu0 %v1049
        %1321 = vmatpush.bf16.msra.mxu0 %v1045
        %1322 = vmatmul.bf16.gmra.mxu0 %v456
        %v1323 = vpop.f32.mrf.mxu0
        %v1324 = vadd.f32 %v1311, %v1323
        %v1325 = vpop.f32.mrf.mxu0
        %1326 = vdwg.mxu0
        %1327 = vmatpush.bf16.msra.mxu0 %v1105
        %1328 = vmatpush.bf16.msra.mxu0 %v1101
        %1329 = vmatpush.bf16.msra.mxu0 %v1097
        %1330 = vmatpush.bf16.msra.mxu0 %v1093
        %1331 = vmatpush.bf16.msra.mxu0 %v1089
        %1332 = vmatpush.bf16.msra.mxu0 %v1085
        %1333 = vmatpush.bf16.msra.mxu0 %v1081
        %1334 = vmatpush.bf16.msra.mxu0 %v1077
        %1335 = vmatmul.bf16.gmra.mxu0 %v457
        %v1336 = vpop.f32.mrf.mxu0
        %v1337 = vadd.f32 %v1324, %v1336
        %v1338 = vpop.f32.mrf.mxu0
        %1339 = vdwg.mxu0
        %1340 = vmatpush.bf16.msra.mxu0 %v1010
        %1341 = vmatpush.bf16.msra.mxu0 %v1006
        %1342 = vmatpush.bf16.msra.mxu0 %v1002
        %1343 = vmatpush.bf16.msra.mxu0 %v998
        %1344 = vmatpush.bf16.msra.mxu0 %v994
        %1345 = vmatpush.bf16.msra.mxu0 %v990
        %1346 = vmatpush.bf16.msra.mxu0 %v986
        %1347 = vmatpush.bf16.msra.mxu0 %v982
        %1348 = vmatmul.bf16.gmra.mxu0 %v454
        %v1349 = vpop.f32.mrf.mxu0
        %v1350 = vadd.f32 %v590, %v1349
        %v1351 = vpop.f32.mrf.mxu0
        %1352 = vdwg.mxu0
        %1353 = vmatpush.bf16.msra.mxu0 %v1042
        %1354 = vmatpush.bf16.msra.mxu0 %v1038
        %1355 = vmatpush.bf16.msra.mxu0 %v1034
        %1356 = vmatpush.bf16.msra.mxu0 %v1030
        %1357 = vmatpush.bf16.msra.mxu0 %v1026
        %1358 = vmatpush.bf16.msra.mxu0 %v1022
        %1359 = vmatpush.bf16.msra.mxu0 %v1018
        %1360 = vmatpush.bf16.msra.mxu0 %v1014
        %1361 = vmatmul.bf16.gmra.mxu0 %v455
        %v1362 = vpop.f32.mrf.mxu0
        %v1363 = vadd.f32 %v1350, %v1362
        %v1364 = vpop.f32.mrf.mxu0
        %1365 = vdwg.mxu0
        %1366 = vmatpush.bf16.msra.mxu0 %v1074
        %1367 = vmatpush.bf16.msra.mxu0 %v1070
        %1368 = vmatpush.bf16.msra.mxu0 %v1066
        %1369 = vmatpush.bf16.msra.mxu0 %v1062
        %1370 = vmatpush.bf16.msra.mxu0 %v1058
        %1371 = vmatpush.bf16.msra.mxu0 %v1054
        %1372 = vmatpush.bf16.msra.mxu0 %v1050
        %1373 = vmatpush.bf16.msra.mxu0 %v1046
        %1374 = vmatmul.bf16.gmra.mxu0 %v456
        %v1375 = vpop.f32.mrf.mxu0
        %v1376 = vadd.f32 %v1363, %v1375
        %v1377 = vpop.f32.mrf.mxu0
        %1378 = vdwg.mxu0
        %1379 = vmatpush.bf16.msra.mxu0 %v1106
        %1380 = vmatpush.bf16.msra.mxu0 %v1102
        %1381 = vmatpush.bf16.msra.mxu0 %v1098
        %1382 = vmatpush.bf16.msra.mxu0 %v1094
        %1383 = vmatpush.bf16.msra.mxu0 %v1090
        %1384 = vmatpush.bf16.msra.mxu0 %v1086
        %1385 = vmatpush.bf16.msra.mxu0 %v1082
        %1386 = vmatpush.bf16.msra.mxu0 %v1078
        %1387 = vmatmul.bf16.gmra.mxu0 %v457
        %v1388 = vpop.f32.mrf.mxu0
        %v1389 = vadd.f32 %v1376, %v1388
        %v1390 = vpop.f32.mrf.mxu0
        %1391 = vdwg.mxu0
        %1392 = vmatpush.bf16.msra.mxu0 %v1011
        %1393 = vmatpush.bf16.msra.mxu0 %v1007
        %1394 = vmatpush.bf16.msra.mxu0 %v1003
        %1395 = vmatpush.bf16.msra.mxu0 %v999
        %1396 = vmatpush.bf16.msra.mxu0 %v995
        %1397 = vmatpush.bf16.msra.mxu0 %v991
        %1398 = vmatpush.bf16.msra.mxu0 %v987
        %1399 = vmatpush.bf16.msra.mxu0 %v983
        %1400 = vmatmul.bf16.gmra.mxu0 %v454
        %v1401 = vpop.f32.mrf.mxu0
        %v1402 = vadd.f32 %v591, %v1401
        %v1403 = vpop.f32.mrf.mxu0
        %1404 = vdwg.mxu0
        %1405 = vmatpush.bf16.msra.mxu0 %v1043
        %1406 = vmatpush.bf16.msra.mxu0 %v1039
        %1407 = vmatpush.bf16.msra.mxu0 %v1035
        %1408 = vmatpush.bf16.msra.mxu0 %v1031
        %1409 = vmatpush.bf16.msra.mxu0 %v1027
        %1410 = vmatpush.bf16.msra.mxu0 %v1023
        %1411 = vmatpush.bf16.msra.mxu0 %v1019
        %1412 = vmatpush.bf16.msra.mxu0 %v1015
        %1413 = vmatmul.bf16.gmra.mxu0 %v455
        %v1414 = vpop.f32.mrf.mxu0
        %v1415 = vadd.f32 %v1402, %v1414
        %v1416 = vpop.f32.mrf.mxu0
        %1417 = vdwg.mxu0
        %1418 = vmatpush.bf16.msra.mxu0 %v1075
        %1419 = vmatpush.bf16.msra.mxu0 %v1071
        %1420 = vmatpush.bf16.msra.mxu0 %v1067
        %1421 = vmatpush.bf16.msra.mxu0 %v1063
        %1422 = vmatpush.bf16.msra.mxu0 %v1059
        %1423 = vmatpush.bf16.msra.mxu0 %v1055
        %1424 = vmatpush.bf16.msra.mxu0 %v1051
        %1425 = vmatpush.bf16.msra.mxu0 %v1047
        %1426 = vmatmul.bf16.gmra.mxu0 %v456
        %v1427 = vpop.f32.mrf.mxu0
        %v1428 = vadd.f32 %v1415, %v1427
        %v1429 = vpop.f32.mrf.mxu0
        %1430 = vdwg.mxu0
        %1431 = vmatpush.bf16.msra.mxu0 %v1107
        %1432 = vmatpush.bf16.msra.mxu0 %v1103
        %1433 = vmatpush.bf16.msra.mxu0 %v1099
        %1434 = vmatpush.bf16.msra.mxu0 %v1095
        %1435 = vmatpush.bf16.msra.mxu0 %v1091
        %1436 = vmatpush.bf16.msra.mxu0 %v1087
        %1437 = vmatpush.bf16.msra.mxu0 %v1083
        %1438 = vmatpush.bf16.msra.mxu0 %v1079
        %1439 = vmatmul.bf16.gmra.mxu0 %v457
        %v1440 = vpop.f32.mrf.mxu0
        %v1441 = vadd.f32 %v1428, %v1440
        %v1442 = vpop.f32.mrf.mxu0
        %1443 = vdwg.mxu0
        %v1444 = vxor.u32 %v1285, 2147483648
        %v1445 = vxor.u32 %v1337, 2147483648
        %v1446 = vxor.u32 %v1389, 2147483648
        %v1447 = vxor.u32 %v1441, 2147483648
        %v1448 = vmul.f32 %v1444, 1.442695
        %v1449 = vpow.pop %v1448
        %v1450 = vmul.f32 %v1445, 1.442695
        %v1451 = vpow.pop %v1450
        %v1452 = vmul.f32 %v1446, 1.442695
        %v1453 = vpow.pop %v1452
        %v1454 = vmul.f32 %v1447, 1.442695
        %v1455 = vpow.pop %v1454
        %v1456 = vadd.f32 %v1449, 1.0
        %v1457 = vadd.f32 %v1451, 1.0
        %v1458 = vadd.f32 %v1453, 1.0
        %v1459 = vadd.f32 %v1455, 1.0
        %v1460 = vrcp.pop %v1456
        %v1461 = vmul.f32 %v1456, %v1460
        %v1462 = vsub.f32 1.0, %v1461
        %v1463 = vmul.f32 %v1460, %v1462
        %v1464 = vadd.f32 %v1460, %v1463
        %vm1465 = vweird.f32 %v1456
        %vm1466 = vweird.f32 %v1460
        %vm1467 = vmor %vm1465, %vm1466
        %v1468 = vsel %vm1467, %v1460, %v1464
        %v1469 = vand.u32 2147483647, %v1456
        %vm1470 = vcmp.eq.f32.partialorder %v1469, 8.507059e+37
        %v1471 = vand.u32 %v1456, 2147483648
        %v1472 = vor.u32 1.1754944e-38, %v1471
        %v1473 = vsel %vm1470, %v1472, %v1468
        %v1474 = vmul.f32 1.0, %v1473
        %v1475 = vrcp.pop %v1457
        %v1476 = vmul.f32 %v1457, %v1475
        %v1477 = vsub.f32 1.0, %v1476
        %v1478 = vmul.f32 %v1475, %v1477
        %v1479 = vadd.f32 %v1475, %v1478
        %vm1480 = vweird.f32 %v1457
        %vm1481 = vweird.f32 %v1475
        %vm1482 = vmor %vm1480, %vm1481
        %v1483 = vsel %vm1482, %v1475, %v1479
        %v1484 = vand.u32 2147483647, %v1457
        %vm1485 = vcmp.eq.f32.partialorder %v1484, 8.507059e+37
        %v1486 = vand.u32 %v1457, 2147483648
        %v1487 = vor.u32 1.1754944e-38, %v1486
        %v1488 = vsel %vm1485, %v1487, %v1483
        %v1489 = vmul.f32 1.0, %v1488
        %v1490 = vrcp.pop %v1458
        %v1491 = vmul.f32 %v1458, %v1490
        %v1492 = vsub.f32 1.0, %v1491
        %v1493 = vmul.f32 %v1490, %v1492
        %v1494 = vadd.f32 %v1490, %v1493
        %vm1495 = vweird.f32 %v1458
        %vm1496 = vweird.f32 %v1490
        %vm1497 = vmor %vm1495, %vm1496
        %v1498 = vsel %vm1497, %v1490, %v1494
        %v1499 = vand.u32 2147483647, %v1458
        %vm1500 = vcmp.eq.f32.partialorder %v1499, 8.507059e+37
        %v1501 = vand.u32 %v1458, 2147483648
        %v1502 = vor.u32 1.1754944e-38, %v1501
        %v1503 = vsel %vm1500, %v1502, %v1498
        %v1504 = vmul.f32 1.0, %v1503
        %v1505 = vrcp.pop %v1459
        %v1506 = vmul.f32 %v1459, %v1505
        %v1507 = vsub.f32 1.0, %v1506
        %v1508 = vmul.f32 %v1505, %v1507
        %v1509 = vadd.f32 %v1505, %v1508
        %vm1510 = vweird.f32 %v1459
        %vm1511 = vweird.f32 %v1505
        %vm1512 = vmor %vm1510, %vm1511
        %v1513 = vsel %vm1512, %v1505, %v1509
        %v1514 = vand.u32 2147483647, %v1459
        %vm1515 = vcmp.eq.f32.partialorder %v1514, 8.507059e+37
        %v1516 = vand.u32 %v1459, 2147483648
        %v1517 = vor.u32 1.1754944e-38, %v1516
        %v1518 = vsel %vm1515, %v1517, %v1513
        %v1519 = vmul.f32 1.0, %v1518
        %1520 = vst [vmem:[%s345] sm:$0xff] %v1474
        %1521 = vst [vmem:[%s345 + $0x8] sm:$0xff] %v1489
        %1522 = vst [vmem:[%s345 + $0x10] sm:$0xff] %v1504
        %1523 = vst [vmem:[%s345 + $0x18] sm:$0xff] %v1519
        %s1524 = sand.u32 %s166, 1
        %s1525 = scalar_lea.sflag [#allocation4], %s1524
        %s1526 = sand.u32 %s166, 1
        %s1527 = smul.addr %s1526, 32
        %s1528 = scalar_lea.vmem [#allocation11], %s1527
        // Predicated region
        $region61: #{tpu_custom_call.1} parent=39 // pred_check
          %p1529 = pneg %p176
        $region62: #{tpu_custom_call.1} parent=39 // pred_check_branch
          %1531 = sbr.rel (%p1529) target = $region64
        $region63: #{tpu_custom_call.1} parent=39 // pred_region
          %s1532 = smul.u32 4, %s28
          %1534 = vsyncadd %s1525, 0
          %s1535 = smul.addr %s29, 8
          %s1536 = sadd.s32 %s1532, %s1535
          %s1537 = smul.addr %s1536, 8
          %s1538 = scalar_lea.hbm %s5, %s1537
          %s1540 = sshll.u32 %s1528, 4
          %s1541 = int_to_ptr.vmem [resolvable:$true] %s1540
          %s1542 = sshll.u32 %s1538, 4
          %s1543 = int_to_ptr.hbm [resolvable:$true] %s1542
          %1545 = dma.vmem_to_hbm [thread:$0]  %s1541, 512, %s1543, %s1525
        $region64: #{tpu_custom_call.1} parent=39 // pred_fallthru
          _
      $region40: #{tpu_custom_call.1} parent=5 // pred_fallthru
        _
      %p1546 = scmp.le.s32.totalorder 2, %s19
      // Predicated region
      $region65: #{tpu_custom_call.1} parent=5 // pred_check
        %p1547 = pneg %p1546
      $region66: #{tpu_custom_call.1} parent=5 // pred_check_branch
        %1549 = sbr.rel (%p1547) target = $region68
      $region67: #{tpu_custom_call.1} parent=5 // pred_region
        %s1550 = ssub.s32 %s19, 2
        // Predicated region
        $region69: #{tpu_custom_call.1} parent=67 // pred_check
          %p1551 = pneg %p182
        $region70: #{tpu_custom_call.1} parent=67 // pred_check_branch
          %1553 = sbr.rel (%p1551) target = $region72
        $region71: #{tpu_custom_call.1} parent=67 // pred_region
          %s1554 = sand.u32 %s167, 1
          %s1555 = scalar_lea.sflag [#allocation4], %s1554
          %s1556 = sand.u32 %s167, 1
          %s1557 = smul.addr %s1556, 32
          %s1558 = scalar_lea.vmem [#allocation11], %s1557
          %1560 = dma.done %s1555, 512
        $region72: #{tpu_custom_call.1} parent=67 // pred_fallthru
          _
      $region68: #{tpu_custom_call.1} parent=5 // pred_fallthru
        _
    $region6: #{tpu_custom_call.1} parent=1 // loop_footer
      %s23 = sadd.s32 1, %s19
    $region7: #{tpu_custom_call.1} parent=1 // loop_footer_branch
      %18 = sbr.rel target = $region3
    $region8: #{tpu_custom_call.1} parent=1 // loop_exit
      _
    %1561 = vsyncpa [#allocation3], 1
    %s1562 = scalar_lea.sflag [#allocation3], 1
    %1563 = vsyncpa %s1562, 1
    %1564 = vsyncpa [#allocation6], 1
    %1565 = vsyncpa [#allocation9], 1
    %s1566 = scalar_lea.sflag [#allocation9], 1
    %1567 = vsyncpa %s1566, 1
    %1568 = vsyncpa [#allocation4], 1
    %s1569 = scalar_lea.sflag [#allocation4], 1
    %1570 = vsyncpa %s1569, 1

</llo_original>
